<compile_context>
chip_gen: v7x
topology: tpu7x:2x2x1
jax: 0.10.0
libtpu: 0.0.40
codegen_flags: <defaults>
</compile_context>

<pallas_src>
import functools

import jax
import jax.numpy as jnp
from jax.experimental import pallas as pl
from jax.experimental.pallas import tpu as pltpu

LANE = 128          # TPU lane width
TILE_M = 128        # rows per grid step (>=128 for good MXU occupancy)


def _mlp_head_kernel(x_ref, w1t_ref, b1_ref, w2t_ref, b2_ref, o_ref):
    # hidden = relu(x @ W1.T + b1)
    h = jnp.dot(x_ref[...], w1t_ref[...], preferred_element_type=jnp.float32)
    h = jnp.maximum(h + b1_ref[...], 0.0)          # b1 is (1, x_size), broadcasts
    # yhat = sigmoid(h @ W2.T + b2)   (W2 pre-padded to a lane-dense slab)
    y = jnp.dot(h, w2t_ref[...], preferred_element_type=jnp.float32)
    o_ref[...] = jax.nn.sigmoid(y + b2_ref[...])   # b2 is (1, yhat_pad)


def prepare_params(w1, b1, w2, b2):
    """One-time parameter prep (torch.nn.Linear [out,in] -> [in,out], lane pad).

    w1: [x_size, x_size], b1: [x_size], w2: [yhat_size, x_size], b2: [yhat_size].
    Returns (w1t, b1r, w2t_pad, b2r_pad, yhat_size).
    """
    x_size = w1.shape[1]
    yhat_size = w2.shape[0]
    yhat_pad = pl.cdiv(yhat_size, LANE) * LANE

    w1t = jnp.transpose(w1).astype(jnp.float32)                       # [x, x]
    b1r = b1.reshape(1, x_size).astype(jnp.float32)                   # [1, x]
    w2t_pad = jnp.zeros((x_size, yhat_pad), jnp.float32)
    w2t_pad = w2t_pad.at[:, :yhat_size].set(jnp.transpose(w2).astype(jnp.float32))
    b2r_pad = jnp.zeros((1, yhat_pad), jnp.float32)
    b2r_pad = b2r_pad.at[:, :yhat_size].set(b2.astype(jnp.float32))
    return w1t, b1r, w2t_pad, b2r_pad, yhat_size


@functools.partial(jax.jit, static_argnames=("yhat_size", "tile_m"))
def nonlinear_rnn_cell_y_batched(x, w1t, b1r, w2t_pad, b2r_pad, *,
                                 yhat_size, tile_m=TILE_M):
    """x: [M, x_size] (any flattened batch/time rows) -> [M, yhat_size]."""
    M, x_size = x.shape
    yhat_pad = w2t_pad.shape[1]

    m_pad = pl.cdiv(M, tile_m) * tile_m
    if m_pad != M:
        x = jnp.pad(x.astype(jnp.float32), ((0, m_pad - M), (0, 0)))
    else:
        x = x.astype(jnp.float32)

    grid = (m_pad // tile_m,)

    flops = 2 * m_pad * (x_size * x_size + x_size * yhat_pad)
    bytes_accessed = 4 * (m_pad * x_size                      # x in
                          + x_size * x_size + x_size          # layer-1 params
                          + x_size * yhat_pad + yhat_pad      # layer-2 params
                          + m_pad * yhat_pad)                 # output slab

    out = pl.pallas_call(
        _mlp_head_kernel,
        out_shape=jax.ShapeDtypeStruct((m_pad, yhat_pad), jnp.float32),
        grid=grid,
        in_specs=[
            pl.BlockSpec((tile_m, x_size), lambda i: (i, 0)),      # x tiles stream
            pl.BlockSpec((x_size, x_size), lambda i: (0, 0)),      # W1^T resident
            pl.BlockSpec((1, x_size), lambda i: (0, 0)),           # b1 resident
            pl.BlockSpec((x_size, yhat_pad), lambda i: (0, 0)),    # W2^T resident
            pl.BlockSpec((1, yhat_pad), lambda i: (0, 0)),         # b2 resident
        ],
        out_specs=pl.BlockSpec((tile_m, yhat_pad), lambda i: (i, 0)),
        compiler_params=pltpu.CompilerParams(
            dimension_semantics=("parallel",),
            vmem_limit_bytes=64 * 1024 * 1024,
        ),
        cost_estimate=pl.CostEstimate(
            flops=flops,
            transcendentals=m_pad * yhat_pad,
            bytes_accessed=bytes_accessed,
        ),
    )(x, w1t, b1r, w2t_pad, b2r_pad)

    return out[:M, :yhat_size]


def nonlinear_rnn_cell_y(x_t, w1t, b1r, w2t_pad, b2r_pad, yhat_size):
    """Single-timestep convenience wrapper (x_t: [B, x_size])."""
    return nonlinear_rnn_cell_y_batched(
        x_t, w1t, b1r, w2t_pad, b2r_pad, yhat_size=yhat_size)


def _ref_forward(x, w1, b1, w2, b2):
    h = jnp.maximum(x @ w1.T + b1, 0.0)
    return jax.nn.sigmoid(h @ w2.T + b2)


if __name__ == "__main__":
    # Small shapes consistent with the module: T timesteps, batch=8,
    # x_size=32, yhat_size=16.  T*B = 256 rows -> grid of 2 tiles of 128.
    T, B, x_size, yhat_size = 32, 8, 32, 16

    key = jax.random.PRNGKey(0)
    k_x, k_w1, k_b1, k_w2, k_b2 = jax.random.split(key, 5)

    # Deterministic init mimicking nn.Linear's U(-1/sqrt(in), 1/sqrt(in))
    bound1 = 1.0 / jnp.sqrt(jnp.float32(x_size))
    w1 = jax.random.uniform(k_w1, (x_size, x_size), jnp.float32, -bound1, bound1)
    b1 = jax.random.uniform(k_b1, (x_size,), jnp.float32, -bound1, bound1)
    w2 = jax.random.uniform(k_w2, (yhat_size, x_size), jnp.float32, -bound1, bound1)
    b2 = jax.random.uniform(k_b2, (yhat_size,), jnp.float32, -bound1, bound1)

    x_seq = jax.random.normal(k_x, (T, B, x_size), jnp.float32)

    # One-time parameter prep (transpose + lane padding), hoisted out of the call.
    w1t, b1r, w2t_pad, b2r_pad, _ = prepare_params(w1, b1, w2, b2)

    # Single launch over all timesteps (the Y head has no recurrence).
    x_flat = x_seq.reshape(T * B, x_size)
    out_flat = nonlinear_rnn_cell_y_batched(
        x_flat, w1t, b1r, w2t_pad, b2r_pad, yhat_size=yhat_size)
    out_flat = jax.block_until_ready(out_flat)
    out_seq = out_flat.reshape(T, B, yhat_size)

    ref_seq = _ref_forward(x_flat, w1, b1, w2, b2).reshape(T, B, yhat_size)
    assert out_seq.shape == (T, B, yhat_size)
    assert jnp.allclose(out_seq, ref_seq, atol=1e-5, rtol=1e-5), "mismatch vs reference"

    # Also exercise the per-timestep API (M=8 < TILE_M; rows get zero-padded).
    out_step = nonlinear_rnn_cell_y(x_seq[0], w1t, b1r, w2t_pad, b2r_pad, yhat_size)
    out_step = jax.block_until_ready(out_step)
    assert out_step.shape == (B, yhat_size)
    assert jnp.allclose(out_step, ref_seq[0], atol=1e-5, rtol=1e-5), "step mismatch"

    print("KERNEL_OK")
</pallas_src>

<mosaic_0001>
module attributes {stable_mosaic.version = 11 : i64} {
  func.func @_mlp_head_kernel(%arg0: i32, %arg1: memref<128x32xf32, #tpu.memory_space<vmem>>, %arg2: memref<32x32xf32, #tpu.memory_space<vmem>>, %arg3: memref<1x32xf32, #tpu.memory_space<vmem>>, %arg4: memref<32x128xf32, #tpu.memory_space<vmem>>, %arg5: memref<1x128xf32, #tpu.memory_space<vmem>>, %arg6: memref<128x128xf32, #tpu.memory_space<vmem>>) attributes {dimension_semantics = [#tpu.dimension_semantics<parallel>], iteration_bounds = array<i64: 2>, scalar_prefetch = 0 : i64, scratch_operands = 0 : i64, tpu.core_type = #tpu.core_type<tc>, window_params = [{transform_indices = @transform_0, window_bounds = array<i64: 128, 32>}, {pipeline_mode = #tpu.pipeline_mode<synchronous>, transform_indices = @transform_1, window_bounds = array<i64: 32, 32>}, {pipeline_mode = #tpu.pipeline_mode<synchronous>, transform_indices = @transform_2, window_bounds = array<i64: 1, 32>}, {pipeline_mode = #tpu.pipeline_mode<synchronous>, transform_indices = @transform_3, window_bounds = array<i64: 32, 128>}, {pipeline_mode = #tpu.pipeline_mode<synchronous>, transform_indices = @transform_4, window_bounds = array<i64: 1, 128>}, {transform_indices = @transform_5, window_bounds = array<i64: 128, 128>}]} {
    %c0 = arith.constant 0 : index
    %c0_0 = arith.constant 0 : index
    %0 = vector.load %arg1[%c0, %c0_0] : memref<128x32xf32, #tpu.memory_space<vmem>>, vector<128x32xf32>
    %c0_1 = arith.constant 0 : index
    %c0_2 = arith.constant 0 : index
    %1 = vector.load %arg2[%c0_1, %c0_2] : memref<32x32xf32, #tpu.memory_space<vmem>>, vector<32x32xf32>
    %cst = arith.constant dense<0.000000e+00> : vector<128x32xf32>
    %2 = tpu.matmul %0, %1, %cst {dimension_numbers = #tpu.dot_dimension_numbers<[1], [0], [0], [1], [0, 0, 1, 1], [], []>} : vector<128x32xf32>, vector<32x32xf32>, vector<128x32xf32> -> vector<128x32xf32>
    %c0_3 = arith.constant 0 : index
    %c0_4 = arith.constant 0 : index
    %3 = vector.load %arg3[%c0_3, %c0_4] : memref<1x32xf32, #tpu.memory_space<vmem>>, vector<1x32xf32>
    %4 = vector.broadcast %3 : vector<1x32xf32> to vector<128x32xf32>
    %5 = arith.addf %2, %4 : vector<128x32xf32>
    %cst_5 = arith.constant 0.000000e+00 : f32
    %6 = vector.broadcast %cst_5 : f32 to vector<128x32xf32>
    %7 = arith.maximumf %5, %6 : vector<128x32xf32>
    %c0_6 = arith.constant 0 : index
    %c0_7 = arith.constant 0 : index
    %8 = vector.load %arg4[%c0_6, %c0_7] : memref<32x128xf32, #tpu.memory_space<vmem>>, vector<32x128xf32>
    %cst_8 = arith.constant dense<0.000000e+00> : vector<128x128xf32>
    %9 = tpu.matmul %7, %8, %cst_8 {dimension_numbers = #tpu.dot_dimension_numbers<[1], [0], [0], [1], [0, 0, 1, 1], [], []>} : vector<128x32xf32>, vector<32x128xf32>, vector<128x128xf32> -> vector<128x128xf32>
    %c0_9 = arith.constant 0 : index
    %c0_10 = arith.constant 0 : index
    %10 = vector.load %arg5[%c0_9, %c0_10] : memref<1x128xf32, #tpu.memory_space<vmem>>, vector<1x128xf32>
    %11 = vector.broadcast %10 : vector<1x128xf32> to vector<128x128xf32>
    %12 = arith.addf %9, %11 : vector<128x128xf32>
    %13 = arith.negf %12 : vector<128x128xf32>
    %14 = math.exp %13 : vector<128x128xf32>
    %cst_11 = arith.constant 1.000000e+00 : f32
    %15 = vector.broadcast %cst_11 : f32 to vector<128x128xf32>
    %16 = arith.addf %15, %14 : vector<128x128xf32>
    %17 = arith.divf %15, %16 : vector<128x128xf32>
    %c0_12 = arith.constant 0 : index
    %c0_13 = arith.constant 0 : index
    %18 = vector.load %arg6[%c0_12, %c0_13] : memref<128x128xf32, #tpu.memory_space<vmem>>, vector<128x128xf32>
    tpu.vector_store %arg6[%c0_12, %c0_13], %17 {strides = array<i32>} : memref<128x128xf32, #tpu.memory_space<vmem>>, vector<128x128xf32>,
    return
  }
  func.func @transform_0(%arg0: i32) -> (i32, i32) {
    %c0_i32 = arith.constant 0 : i32
    %c0_i32_0 = arith.constant 0 : i32
    return %arg0, %c0_i32 : i32, i32
  }
  func.func @transform_1(%arg0: i32) -> (i32, i32) {
    %c0_i32 = arith.constant 0 : i32
    %c0_i32_0 = arith.constant 0 : i32
    %c0_i32_1 = arith.constant 0 : i32
    return %c0_i32, %c0_i32_0 : i32, i32
  }
  func.func @transform_2(%arg0: i32) -> (i32, i32) {
    %c0_i32 = arith.constant 0 : i32
    %c0_i32_0 = arith.constant 0 : i32
    %c0_i32_1 = arith.constant 0 : i32
    return %c0_i32, %c0_i32_0 : i32, i32
  }
  func.func @transform_3(%arg0: i32) -> (i32, i32) {
    %c0_i32 = arith.constant 0 : i32
    %c0_i32_0 = arith.constant 0 : i32
    %c0_i32_1 = arith.constant 0 : i32
    return %c0_i32, %c0_i32_0 : i32, i32
  }
  func.func @transform_4(%arg0: i32) -> (i32, i32) {
    %c0_i32 = arith.constant 0 : i32
    %c0_i32_0 = arith.constant 0 : i32
    %c0_i32_1 = arith.constant 0 : i32
    return %c0_i32, %c0_i32_0 : i32, i32
  }
  func.func @transform_5(%arg0: i32) -> (i32, i32) {
    %c0_i32 = arith.constant 0 : i32
    %c0_i32_0 = arith.constant 0 : i32
    return %arg0, %c0_i32 : i32, i32
  }
}

</mosaic_0001>

<llo_original>
// kernel: nonlinear_rnn_cell_y_batched.1
$region0: #{nonlinear_rnn_cell_y_batched.1}
  #allocation0 [shape = 'u32[]', space=smem, size = 0x4, offset = 0x4, fixed_abs, tag = 'smem constant byte address 0x4 - core index']
  #allocation1 [shape = 'u32[144,128]{1,0:T(1,128)}', space=vmem, size = 0x12000, scoped, tag = 'internal scratch']
  %s0 = inlined_call_operand.hbm [shape: f32[256,32], index: 0, kind: input, shape index: {}]
  %s1 = inlined_call_operand.hbm [shape: f32[32,32], index: 1, kind: input, shape index: {}]
  %s2 = inlined_call_operand.hbm [shape: f32[1,32], index: 2, kind: input, shape index: {}]
  %s3 = inlined_call_operand.hbm [shape: f32[32,128], index: 3, kind: input, shape index: {}]
  %s4 = inlined_call_operand.hbm [shape: f32[1,128], index: 4, kind: input, shape index: {}]
  %s5 = inlined_call_operand.hbm [shape: f32[256,128], index: 5, kind: output, shape index: {}]
  %s6 = sld [smem:[#allocation0]]
  $region73: #{nonlinear_rnn_cell_y_batched.1} parent=0
    _
  %s8 = ssub.s32 1, %s6
  %s9 = scalar_select 0, %s8, %s6
  $region1: #{nonlinear_rnn_cell_y_batched.1} parent=0
    #allocation2 [shape = 'u8[131072]{0}', space=vmem, size = 0x20000, scoped, tag = 'input window, operand 0']
    #allocation3 [shape = 's32[2]{0}', space=sflag, size = 0x8, scoped, tag = 'scoped memory for nonlinear_rnn_cell_y_batched.1']
    #allocation4 [shape = 's32[2]{0}', space=sflag, size = 0x8, scoped, tag = 'scoped memory for nonlinear_rnn_cell_y_batched.1']
    #allocation5 [shape = 'u8[16384]{0}', space=vmem, size = 0x4000, scoped, tag = 'input window, operand 1, single buffered']
    #allocation6 [shape = 's32[1]{0}', space=sflag, size = 0x4, scoped, tag = 'scoped memory for nonlinear_rnn_cell_y_batched.1']
    #allocation7 [shape = 'u8[512]{0}', space=vmem, size = 0x400, scoped, tag = 'input window, operand 2, single buffered']
    #allocation8 [shape = 'u8[16384]{0}', space=vmem, size = 0x4000, scoped, tag = 'input window, operand 3, single buffered']
    #allocation9 [shape = 's32[1]{0}', space=sflag, size = 0x4, scoped, tag = 'scoped memory for nonlinear_rnn_cell_y_batched.1']
    #allocation10 [shape = 'u8[512]{0}', space=vmem, size = 0x400, scoped, tag = 'input window, operand 4, single buffered']
    #allocation11 [shape = 'u8[131072]{0}', space=vmem, size = 0x20000, scoped, tag = 'output window, operand 0']
    %10 = vsyncpa [#allocation3], 0
    %s11 = scalar_lea.sflag [#allocation3], 1
    %12 = vsyncpa %s11, 0
    %13 = vsyncpa [#allocation6], 0
    %14 = vsyncpa [#allocation9], 0
    %15 = vsyncpa [#allocation4], 0
    %s16 = scalar_lea.sflag [#allocation4], 1
    %17 = vsyncpa %s16, 0
    loop: start=0, step=1, limit=4
    $region2: #{nonlinear_rnn_cell_y_batched.1} parent=1 // loop_pre_header
      _
    $region3: #{nonlinear_rnn_cell_y_batched.1} parent=1 // loop_header
      %s19 = sphi 0, %s23
      %p20 = scmp.ge.s32.totalorder %s19, 4
      %s29 = sphi 0, %s31
      %s32 = sphi 0, %s29
      %s33 = sphi 0, %s32
      %s49 = sphi 0, %s33
      %s53 = sphi 0, %s53
      %s55 = sphi 0, %s53
      %s56 = sphi 0, %s55
      %s70 = sphi 0, %s56
      %s74 = sphi 0, %s74
      %s76 = sphi 0, %s74
      %s77 = sphi 0, %s76
      %s91 = sphi 0, %s77
      %s95 = sphi 0, %s95
      %s97 = sphi 0, %s95
      %s98 = sphi 0, %s97
      %s112 = sphi 0, %s98
      %s116 = sphi 0, %s116
      %s118 = sphi 0, %s116
      %s119 = sphi 0, %s118
      %s133 = sphi 0, %s119
      %s139 = sphi 0, %s141
      %s142 = sphi 0, %s139
      %s143 = sphi 0, %s142
      %s159 = sphi 0, %s143
    $region4: #{nonlinear_rnn_cell_y_batched.1} parent=1 // loop_header_branch
      %22 = sbr.rel (%p20) target = $region8
    $region5: #{nonlinear_rnn_cell_y_batched.1} parent=1 // loop_body
      %s24 = ssub.s32 %s19, 1
      %s25 = ssub.s32 %s19, 2
      %s26 = sadd.s32 %s19, 1
      %s27 = ssub.s32 %s19, %s26
      %p28 = scmp.eq.s32.totalorder %s27, 0
      %s30 = sadd.s32 %s29, 1
      %s31 = scalar_select %p28, %s29, %s30
      %p34 = pneg %p28
      %p35 = scmp.eq.s32.totalorder %s19, 1
      %p36 = por %p34, %p35
      %p37 = scmp.ne.s32.totalorder %s29, %s32
      %p38 = scmp.eq.s32.totalorder %s19, 0
      %p39 = por %p37, %p38
      %p40 = scmp.ne.s32.totalorder %s29, %s32
      %p41 = scmp.eq.s32.totalorder %s24, 1
      %p42 = por %p40, %p41
      %p43 = scmp.ne.s32.totalorder %s32, %s33
      %p44 = scmp.eq.s32.totalorder %s24, 0
      %p45 = por %p43, %p44
      %p46 = scmp.ne.s32.totalorder %s32, %s33
      %p47 = scmp.eq.s32.totalorder %s25, 1
      %p48 = por %p46, %p47
      %p50 = scmp.ne.s32.totalorder %s33, %s49
      %p51 = scmp.eq.s32.totalorder %s25, 0
      %p52 = por %p50, %p51
      %s54 = sadd.s32 %s53, 1
      %p57 = scmp.eq.s32.totalorder %s19, 1
      %p58 = scmp.ne.s32.totalorder %s53, %s55
      %p59 = scmp.eq.s32.totalorder %s19, 0
      %p60 = por %p58, %p59
      %p61 = scmp.ne.s32.totalorder %s53, %s55
      %p62 = scmp.eq.s32.totalorder %s24, 1
      %p63 = por %p61, %p62
      %p64 = scmp.ne.s32.totalorder %s55, %s56
      %p65 = scmp.eq.s32.totalorder %s24, 0
      %p66 = por %p64, %p65
      %p67 = scmp.ne.s32.totalorder %s55, %s56
      %p68 = scmp.eq.s32.totalorder %s25, 1
      %p69 = por %p67, %p68
      %p71 = scmp.ne.s32.totalorder %s56, %s70
      %p72 = scmp.eq.s32.totalorder %s25, 0
      %p73 = por %p71, %p72
      %s75 = sadd.s32 %s74, 1
      %p78 = scmp.eq.s32.totalorder %s19, 1
      %p79 = scmp.ne.s32.totalorder %s74, %s76
      %p80 = scmp.eq.s32.totalorder %s19, 0
      %p81 = por %p79, %p80
      %p82 = scmp.ne.s32.totalorder %s74, %s76
      %p83 = scmp.eq.s32.totalorder %s24, 1
      %p84 = por %p82, %p83
      %p85 = scmp.ne.s32.totalorder %s76, %s77
      %p86 = scmp.eq.s32.totalorder %s24, 0
      %p87 = por %p85, %p86
      %p88 = scmp.ne.s32.totalorder %s76, %s77
      %p89 = scmp.eq.s32.totalorder %s25, 1
      %p90 = por %p88, %p89
      %p92 = scmp.ne.s32.totalorder %s77, %s91
      %p93 = scmp.eq.s32.totalorder %s25, 0
      %p94 = por %p92, %p93
      %s96 = sadd.s32 %s95, 1
      %p99 = scmp.eq.s32.totalorder %s19, 1
      %p100 = scmp.ne.s32.totalorder %s95, %s97
      %p101 = scmp.eq.s32.totalorder %s19, 0
      %p102 = por %p100, %p101
      %p103 = scmp.ne.s32.totalorder %s95, %s97
      %p104 = scmp.eq.s32.totalorder %s24, 1
      %p105 = por %p103, %p104
      %p106 = scmp.ne.s32.totalorder %s97, %s98
      %p107 = scmp.eq.s32.totalorder %s24, 0
      %p108 = por %p106, %p107
      %p109 = scmp.ne.s32.totalorder %s97, %s98
      %p110 = scmp.eq.s32.totalorder %s25, 1
      %p111 = por %p109, %p110
      %p113 = scmp.ne.s32.totalorder %s98, %s112
      %p114 = scmp.eq.s32.totalorder %s25, 0
      %p115 = por %p113, %p114
      %s117 = sadd.s32 %s116, 1
      %p120 = scmp.eq.s32.totalorder %s19, 1
      %p121 = scmp.ne.s32.totalorder %s116, %s118
      %p122 = scmp.eq.s32.totalorder %s19, 0
      %p123 = por %p121, %p122
      %p124 = scmp.ne.s32.totalorder %s116, %s118
      %p125 = scmp.eq.s32.totalorder %s24, 1
      %p126 = por %p124, %p125
      %p127 = scmp.ne.s32.totalorder %s118, %s119
      %p128 = scmp.eq.s32.totalorder %s24, 0
      %p129 = por %p127, %p128
      %p130 = scmp.ne.s32.totalorder %s118, %s119
      %p131 = scmp.eq.s32.totalorder %s25, 1
      %p132 = por %p130, %p131
      %p134 = scmp.ne.s32.totalorder %s119, %s133
      %p135 = scmp.eq.s32.totalorder %s25, 0
      %p136 = por %p134, %p135
      %s137 = ssub.s32 %s19, %s26
      %p138 = scmp.eq.s32.totalorder %s137, 0
      %s140 = sadd.s32 %s139, 1
      %s141 = scalar_select %p138, %s139, %s140
      %p144 = pneg %p138
      %p145 = scmp.eq.s32.totalorder %s19, 1
      %p146 = por %p144, %p145
      %p147 = scmp.ne.s32.totalorder %s139, %s142
      %p148 = scmp.eq.s32.totalorder %s19, 0
      %p149 = por %p147, %p148
      %p150 = scmp.ne.s32.totalorder %s139, %s142
      %p151 = scmp.eq.s32.totalorder %s24, 1
      %p152 = por %p150, %p151
      %p153 = scmp.ne.s32.totalorder %s142, %s143
      %p154 = scmp.eq.s32.totalorder %s24, 0
      %p155 = por %p153, %p154
      %p156 = scmp.ne.s32.totalorder %s142, %s143
      %p157 = scmp.eq.s32.totalorder %s25, 1
      %p158 = por %p156, %p157
      %p160 = scmp.ne.s32.totalorder %s143, %s159
      %p161 = scmp.eq.s32.totalorder %s25, 0
      %p162 = por %p160, %p161
      %p163 = scmp.le.s32.totalorder 1, %s19
      %p164 = scmp.lt.s32.totalorder %s19, 3
      %p165 = pnand %p163, %p164
      %p166 = pneg %p165
      // Predicated region
      $region9: #{nonlinear_rnn_cell_y_batched.1} parent=5 // pred_check
        _
      $region10: #{nonlinear_rnn_cell_y_batched.1} parent=5 // pred_check_branch
        %168 = sbr.rel (%p165) target = $region12
      $region11: #{nonlinear_rnn_cell_y_batched.1} parent=5 // pred_region
        %s169 = ssub.s32 %s19, 1
        // Predicated region
        $region13: #{nonlinear_rnn_cell_y_batched.1} parent=11 // pred_check
          %p170 = pneg %p66
        $region14: #{nonlinear_rnn_cell_y_batched.1} parent=11 // pred_check_branch
          %172 = sbr.rel (%p170) target = $region16
        $region15: #{nonlinear_rnn_cell_y_batched.1} parent=11 // pred_region
          %s174 = ssub.s32 512, 512
          %175 = vsyncadd [#allocation6], %s174
          %s176 = sshll.u32 [#allocation5], 4
          %s177 = int_to_ptr.vmem [resolvable:$true] %s176
          %182 = dma.hbm_to_vmem [thread:$0]  %s1, 512, %s177, [#allocation6], 128, 128, 8
        $region16: #{nonlinear_rnn_cell_y_batched.1} parent=11 // pred_fallthru
          _
        // Predicated region
        $region17: #{nonlinear_rnn_cell_y_batched.1} parent=11 // pred_check
          %p183 = pneg %p87
        $region18: #{nonlinear_rnn_cell_y_batched.1} parent=11 // pred_check_branch
          %185 = sbr.rel (%p183) target = $region20
        $region19: #{nonlinear_rnn_cell_y_batched.1} parent=11 // pred_region
          %s187 = ssub.s32 16, 16
          %188 = vsyncadd [#allocation6], %s187
          %s190 = sshll.u32 [#allocation7], 4
          %s191 = int_to_ptr.vmem [resolvable:$true] %s190
          %193 = dma.hbm_to_vmem [thread:$0]  %s2, 16, %s191, [#allocation6]
        $region20: #{nonlinear_rnn_cell_y_batched.1} parent=11 // pred_fallthru
          _
        // Predicated region
        $region21: #{nonlinear_rnn_cell_y_batched.1} parent=11 // pred_check
          %p194 = pneg %p108
        $region22: #{nonlinear_rnn_cell_y_batched.1} parent=11 // pred_check_branch
          %196 = sbr.rel (%p194) target = $region24
        $region23: #{nonlinear_rnn_cell_y_batched.1} parent=11 // pred_region
          %s198 = ssub.s32 512, 512
          %199 = vsyncadd [#allocation9], %s198
          %s200 = sshll.u32 [#allocation8], 4
          %s201 = int_to_ptr.vmem [resolvable:$true] %s200
          %206 = dma.hbm_to_vmem [thread:$0]  %s3, 512, %s201, [#allocation9], 128, 128, 8
        $region24: #{nonlinear_rnn_cell_y_batched.1} parent=11 // pred_fallthru
          _
        // Predicated region
        $region25: #{nonlinear_rnn_cell_y_batched.1} parent=11 // pred_check
          %p207 = pneg %p129
        $region26: #{nonlinear_rnn_cell_y_batched.1} parent=11 // pred_check_branch
          %209 = sbr.rel (%p207) target = $region28
        $region27: #{nonlinear_rnn_cell_y_batched.1} parent=11 // pred_region
          %s211 = ssub.s32 16, 16
          %212 = vsyncadd [#allocation9], %s211
          %s214 = sshll.u32 [#allocation10], 4
          %s215 = int_to_ptr.vmem [resolvable:$true] %s214
          %217 = dma.hbm_to_vmem [thread:$0]  %s4, 16, %s215, [#allocation9]
        $region28: #{nonlinear_rnn_cell_y_batched.1} parent=11 // pred_fallthru
          _
      $region12: #{nonlinear_rnn_cell_y_batched.1} parent=5 // pred_fallthru
        _
      %p218 = scmp.lt.s32.totalorder %s19, 2
      // Predicated region
      $region29: #{nonlinear_rnn_cell_y_batched.1} parent=5 // pred_check
        %p219 = pneg %p218
      $region30: #{nonlinear_rnn_cell_y_batched.1} parent=5 // pred_check_branch
        %221 = sbr.rel (%p219) target = $region32
      $region31: #{nonlinear_rnn_cell_y_batched.1} parent=5 // pred_region
        // Predicated region
        $region33: #{nonlinear_rnn_cell_y_batched.1} parent=31 // pred_check
          %p222 = pneg %p39
        $region34: #{nonlinear_rnn_cell_y_batched.1} parent=31 // pred_check_branch
          %224 = sbr.rel (%p222) target = $region36
        $region35: #{nonlinear_rnn_cell_y_batched.1} parent=31 // pred_region
          %s225 = sand.u32 %s29, 1
          %s226 = scalar_lea.sflag [#allocation3], %s225
          %s227 = sand.u32 %s29, 1
          %s228 = smul.addr %s227, 128
          %s229 = scalar_lea.vmem [#allocation2], %s228
          %s230 = smul.u32 16, %s19
          %s232 = ssub.s32 2048, 2048
          %233 = vsyncadd %s226, %s232
          %s234 = smul.addr %s230, 128
          %s235 = scalar_lea.hbm %s0, %s234
          %s236 = sshll.u32 %s229, 4
          %s237 = int_to_ptr.vmem [resolvable:$true] %s236
          %242 = dma.hbm_to_vmem [thread:$0]  %s235, 2048, %s237, %s226, 128, 128, 8
        $region36: #{nonlinear_rnn_cell_y_batched.1} parent=31 // pred_fallthru
          _
      $region32: #{nonlinear_rnn_cell_y_batched.1} parent=5 // pred_fallthru
        _
      %p243 = scmp.le.s32.totalorder 1, %s19
      %p244 = scmp.lt.s32.totalorder %s19, 3
      %p245 = pnand %p243, %p244
      %p246 = pneg %p245
      // Predicated region
      $region37: #{nonlinear_rnn_cell_y_batched.1} parent=5 // pred_check
        _
      $region38: #{nonlinear_rnn_cell_y_batched.1} parent=5 // pred_check_branch
        %248 = sbr.rel (%p245) target = $region40
      $region39: #{nonlinear_rnn_cell_y_batched.1} parent=5 // pred_region
        %s249 = ssub.s32 %s19, 1
        %s250 = sand.u32 %s32, 1
        %s251 = scalar_lea.sflag [#allocation3], %s250
        %s252 = sand.u32 %s32, 1
        %s253 = smul.addr %s252, 128
        %s254 = scalar_lea.vmem [#allocation2], %s253
        // Predicated region
        $region41: #{nonlinear_rnn_cell_y_batched.1} parent=39 // pred_check
          %p255 = pneg %p45
        $region42: #{nonlinear_rnn_cell_y_batched.1} parent=39 // pred_check_branch
          %257 = sbr.rel (%p255) target = $region44
        $region43: #{nonlinear_rnn_cell_y_batched.1} parent=39 // pred_region
          %258 = dma.done %s251, 2048
        $region44: #{nonlinear_rnn_cell_y_batched.1} parent=39 // pred_fallthru
          _
        // Predicated region
        $region45: #{nonlinear_rnn_cell_y_batched.1} parent=39 // pred_check
          %p259 = pneg %p66
        $region46: #{nonlinear_rnn_cell_y_batched.1} parent=39 // pred_check_branch
          %261 = sbr.rel (%p259) target = $region48
        $region47: #{nonlinear_rnn_cell_y_batched.1} parent=39 // pred_region
          %262 = dma.done [#allocation6], 512
        $region48: #{nonlinear_rnn_cell_y_batched.1} parent=39 // pred_fallthru
          _
        // Predicated region
        $region49: #{nonlinear_rnn_cell_y_batched.1} parent=39 // pred_check
          %p263 = pneg %p87
        $region50: #{nonlinear_rnn_cell_y_batched.1} parent=39 // pred_check_branch
          %265 = sbr.rel (%p263) target = $region52
        $region51: #{nonlinear_rnn_cell_y_batched.1} parent=39 // pred_region
          %266 = dma.done [#allocation6], 16
        $region52: #{nonlinear_rnn_cell_y_batched.1} parent=39 // pred_fallthru
          _
        // Predicated region
        $region53: #{nonlinear_rnn_cell_y_batched.1} parent=39 // pred_check
          %p267 = pneg %p108
        $region54: #{nonlinear_rnn_cell_y_batched.1} parent=39 // pred_check_branch
          %269 = sbr.rel (%p267) target = $region56
        $region55: #{nonlinear_rnn_cell_y_batched.1} parent=39 // pred_region
          %270 = dma.done [#allocation9], 512
        $region56: #{nonlinear_rnn_cell_y_batched.1} parent=39 // pred_fallthru
          _
        // Predicated region
        $region57: #{nonlinear_rnn_cell_y_batched.1} parent=39 // pred_check
          %p271 = pneg %p129
        $region58: #{nonlinear_rnn_cell_y_batched.1} parent=39 // pred_check_branch
          %273 = sbr.rel (%p271) target = $region60
        $region59: #{nonlinear_rnn_cell_y_batched.1} parent=39 // pred_region
          %274 = dma.done [#allocation9], 16
        $region60: #{nonlinear_rnn_cell_y_batched.1} parent=39 // pred_fallthru
          _
        %s275 = sand.u32 %s32, 1
        %s276 = scalar_lea.sflag [#allocation3], %s275
        %s277 = sand.u32 %s32, 1
        %s278 = smul.addr %s277, 128
        %s279 = scalar_lea.vmem [#allocation2], %s278
        %p280 = pneg %p45
        %p281 = pneg %p42
        %p282 = pneg %p66
        %p283 = pneg %p63
        %p284 = pneg %p87
        %p285 = pneg %p84
        %p286 = pneg %p108
        %p287 = pneg %p105
        %p288 = pneg %p129
        %p289 = pneg %p126
        %p290 = pneg %p155
        %p291 = pneg %p152
        %s292 = sand.u32 %s142, 1
        %s293 = scalar_lea.sflag [#allocation4], %s292
        %s294 = sand.u32 %s142, 1
        %s295 = smul.addr %s294, 128
        %s296 = scalar_lea.vmem [#allocation11], %s295
        %s297 = smul.u32 16, %s24
        %s298 = smul.u32 16, %s24
        %v299 = vld [vmem:[%s254] sm:$0xff]
        %v300 = vld [vmem:[%s254 + $0x8] sm:$0xff]
        %v301 = vld [vmem:[%s254 + $0x10] sm:$0xff]
        %v302 = vld [vmem:[%s254 + $0x18] sm:$0xff]
        %v303 = vld [vmem:[%s254 + $0x20] sm:$0xff]
        %v304 = vld [vmem:[%s254 + $0x28] sm:$0xff]
        %v305 = vld [vmem:[%s254 + $0x30] sm:$0xff]
        %v306 = vld [vmem:[%s254 + $0x38] sm:$0xff]
        %v307 = vld [vmem:[%s254 + $0x40] sm:$0xff]
        %v308 = vld [vmem:[%s254 + $0x48] sm:$0xff]
        %v309 = vld [vmem:[%s254 + $0x50] sm:$0xff]
        %v310 = vld [vmem:[%s254 + $0x58] sm:$0xff]
        %v311 = vld [vmem:[%s254 + $0x60] sm:$0xff]
        %v312 = vld [vmem:[%s254 + $0x68] sm:$0xff]
        %v313 = vld [vmem:[%s254 + $0x70] sm:$0xff]
        %v314 = vld [vmem:[%s254 + $0x78] sm:$0xff]
        %v315 = vld [vmem:[#allocation5] sm:$0xff]
        %v316 = vld [vmem:[#allocation5 + $0x8] sm:$0xff]
        %v317 = vld [vmem:[#allocation5 + $0x10] sm:$0xff]
        %v318 = vld [vmem:[#allocation5 + $0x18] sm:$0xff]
        %v319 = vld [vmem:[#allocation7] sm:$0x1]
        %v321 = vlaneseq
        %v322 = vshrl.u32 %v321, 7
        %v323 = vsub.s32 0, %v322
        %v324 = vrot.slane %v319, %v323
        %vm326 = vcmask 261120
        %v328 = vsel %vm326, %v299, 0
        %v331 = vsel %vm326, %v300, 0
        %v334 = vsel %vm326, %v301, 0
        %v337 = vsel %vm326, %v302, 0
        %v340 = vsel %vm326, %v303, 0
        %v343 = vsel %vm326, %v304, 0
        %v346 = vsel %vm326, %v305, 0
        %v349 = vsel %vm326, %v306, 0
        %v352 = vsel %vm326, %v307, 0
        %v355 = vsel %vm326, %v308, 0
        %v358 = vsel %vm326, %v309, 0
        %v361 = vsel %vm326, %v310, 0
        %v364 = vsel %vm326, %v311, 0
        %v367 = vsel %vm326, %v312, 0
        %v370 = vsel %vm326, %v313, 0
        %v373 = vsel %vm326, %v314, 0
        %375 = vmatprep.subr.mxu0 0.0
        %376 = vmatpush1.msra.mxu0 %v315
        %377 = vmatprep.subr.mxu0 0.0
        %378 = vmatpush1.msra.mxu0 %v316
        %379 = vmatprep.subr.mxu0 0.0
        %380 = vmatpush1.msra.mxu0 %v317
        %381 = vmatprep.subr.mxu0 0.0
        %382 = vmatpush1.msra.mxu0 %v318
        %383 = vmatprep.subr.mxu0 0.0
        %384 = vmatpush1.msra.mxu0 0.0
        %385 = vmatprep.subr.mxu0 0.0
        %386 = vmatpush1.msra.mxu0 0.0
        %387 = vmatprep.subr.mxu0 0.0
        %388 = vmatpush1.msra.mxu0 0.0
        %389 = vmatprep.subr.mxu0 0.0
        %390 = vmatpush1.msra.mxu0 0.0
        %391 = vmatprep.subr.mxu0 0.0
        %392 = vmatpush1.msra.mxu0 0.0
        %393 = vmatprep.subr.mxu0 0.0
        %394 = vmatpush1.msra.mxu0 0.0
        %395 = vmatprep.subr.mxu0 0.0
        %396 = vmatpush1.msra.mxu0 0.0
        %397 = vmatprep.subr.mxu0 0.0
        %398 = vmatpush1.msra.mxu0 0.0
        %399 = vmatprep.subr.mxu0 0.0
        %400 = vmatpush1.msra.mxu0 0.0
        %401 = vmatprep.subr.mxu0 0.0
        %402 = vmatpush1.msra.mxu0 0.0
        %403 = vmatprep.subr.mxu0 0.0
        %404 = vmatpush1.msra.mxu0 0.0
        %405 = vmatprep.subr.mxu0 0.0
        %406 = vmatpush1.msra.mxu0 0.0
        %407 = vmatprep.subr.mxu0 0.0
        %408 = vmatpush1.msra.mxu0 0.0
        %409 = vmatprep.subr.mxu0 0.0
        %410 = vmatpush1.msra.mxu0 0.0
        %411 = vmatprep.subr.mxu0 0.0
        %412 = vmatpush1.msra.mxu0 0.0
        %413 = vmatprep.subr.mxu0 0.0
        %414 = vmatpush1.msra.mxu0 0.0
        %415 = vmatprep.subr.mxu0 0.0
        %416 = vmatpush1.msra.mxu0 0.0
        %417 = vmatprep.subr.mxu0 0.0
        %418 = vmatpush1.msra.mxu0 0.0
        %419 = vmatprep.subr.mxu0 0.0
        %420 = vmatpush1.msra.mxu0 0.0
        %421 = vmatprep.subr.mxu0 0.0
        %422 = vmatpush1.msra.mxu0 0.0
        %423 = vmatprep.subr.mxu0 0.0
        %424 = vmatpush1.msra.mxu0 0.0
        %425 = vmatprep.subr.mxu0 0.0
        %426 = vmatpush1.msra.mxu0 0.0
        %427 = vmatprep.subr.mxu0 0.0
        %428 = vmatpush1.msra.mxu0 0.0
        %429 = vmatprep.subr.mxu0 0.0
        %430 = vmatpush1.msra.mxu0 0.0
        %431 = vmatprep.subr.mxu0 0.0
        %432 = vmatpush1.msra.mxu0 0.0
        %433 = vmatprep.subr.mxu0 0.0
        %434 = vmatpush1.msra.mxu0 0.0
        %435 = vmatprep.subr.mxu0 0.0
        %436 = vmatpush1.msra.mxu0 0.0
        %437 = vmatprep.subr.mxu0 0.0
        %438 = vmatpush1.msra.mxu0 0.0
        %439 = vmatprep.mubr.f32.mxu0 0.0
        %440 = vmatmul.mubr.f32.gmra.mrb[0].mxu0 %v328
        %v441 = vpop.f32.mrb[0].mxu0
        %v442 = vadd.f32 %v324, %v441
        %v443 = vpop.f32.mrb[0].mxu0
        %444 = vmatprep.mubr.f32.mxu0 0.0
        %445 = vmatmul.mubr.f32.gmra.mrb[0].mxu0 %v331
        %v446 = vpop.f32.mrb[0].mxu0
        %v447 = vadd.f32 %v324, %v446
        %v448 = vpop.f32.mrb[0].mxu0
        %449 = vmatprep.mubr.f32.mxu0 0.0
        %450 = vmatmul.mubr.f32.gmra.mrb[0].mxu0 %v334
        %v451 = vpop.f32.mrb[0].mxu0
        %v452 = vadd.f32 %v324, %v451
        %v453 = vpop.f32.mrb[0].mxu0
        %454 = vmatprep.mubr.f32.mxu0 0.0
        %455 = vmatmul.mubr.f32.gmra.mrb[0].mxu0 %v337
        %v456 = vpop.f32.mrb[0].mxu0
        %v457 = vadd.f32 %v324, %v456
        %v458 = vpop.f32.mrb[0].mxu0
        %459 = vmatprep.mubr.f32.mxu0 0.0
        %460 = vmatmul.mubr.f32.gmra.mrb[0].mxu0 %v340
        %v461 = vpop.f32.mrb[0].mxu0
        %v462 = vadd.f32 %v324, %v461
        %v463 = vpop.f32.mrb[0].mxu0
        %464 = vmatprep.mubr.f32.mxu0 0.0
        %465 = vmatmul.mubr.f32.gmra.mrb[0].mxu0 %v343
        %v466 = vpop.f32.mrb[0].mxu0
        %v467 = vadd.f32 %v324, %v466
        %v468 = vpop.f32.mrb[0].mxu0
        %469 = vmatprep.mubr.f32.mxu0 0.0
        %470 = vmatmul.mubr.f32.gmra.mrb[0].mxu0 %v346
        %v471 = vpop.f32.mrb[0].mxu0
        %v472 = vadd.f32 %v324, %v471
        %v473 = vpop.f32.mrb[0].mxu0
        %474 = vmatprep.mubr.f32.mxu0 0.0
        %475 = vmatmul.mubr.f32.gmra.mrb[0].mxu0 %v349
        %v476 = vpop.f32.mrb[0].mxu0
        %v477 = vadd.f32 %v324, %v476
        %v478 = vpop.f32.mrb[0].mxu0
        %479 = vmatprep.mubr.f32.mxu0 0.0
        %480 = vmatmul.mubr.f32.gmra.mrb[0].mxu0 %v352
        %v481 = vpop.f32.mrb[0].mxu0
        %v482 = vadd.f32 %v324, %v481
        %v483 = vpop.f32.mrb[0].mxu0
        %484 = vmatprep.mubr.f32.mxu0 0.0
        %485 = vmatmul.mubr.f32.gmra.mrb[0].mxu0 %v355
        %v486 = vpop.f32.mrb[0].mxu0
        %v487 = vadd.f32 %v324, %v486
        %v488 = vpop.f32.mrb[0].mxu0
        %489 = vmatprep.mubr.f32.mxu0 0.0
        %490 = vmatmul.mubr.f32.gmra.mrb[0].mxu0 %v358
        %v491 = vpop.f32.mrb[0].mxu0
        %v492 = vadd.f32 %v324, %v491
        %v493 = vpop.f32.mrb[0].mxu0
        %494 = vmatprep.mubr.f32.mxu0 0.0
        %495 = vmatmul.mubr.f32.gmra.mrb[0].mxu0 %v361
        %v496 = vpop.f32.mrb[0].mxu0
        %v497 = vadd.f32 %v324, %v496
        %v498 = vpop.f32.mrb[0].mxu0
        %499 = vmatprep.mubr.f32.mxu0 0.0
        %500 = vmatmul.mubr.f32.gmra.mrb[0].mxu0 %v364
        %v501 = vpop.f32.mrb[0].mxu0
        %v502 = vadd.f32 %v324, %v501
        %v503 = vpop.f32.mrb[0].mxu0
        %504 = vmatprep.mubr.f32.mxu0 0.0
        %505 = vmatmul.mubr.f32.gmra.mrb[0].mxu0 %v367
        %v506 = vpop.f32.mrb[0].mxu0
        %v507 = vadd.f32 %v324, %v506
        %v508 = vpop.f32.mrb[0].mxu0
        %509 = vmatprep.mubr.f32.mxu0 0.0
        %510 = vmatmul.mubr.f32.gmra.mrb[0].mxu0 %v370
        %v511 = vpop.f32.mrb[0].mxu0
        %v512 = vadd.f32 %v324, %v511
        %v513 = vpop.f32.mrb[0].mxu0
        %514 = vmatprep.mubr.f32.mxu0 0.0
        %515 = vmatmul.mubr.f32.gmra.mrb[0].mxu0 %v373
        %v516 = vpop.f32.mrb[0].mxu0
        %v517 = vadd.f32 %v324, %v516
        %v518 = vpop.f32.mrb[0].mxu0
        %519 = vdwg.mxu0
        %v520 = vmax.f32 %v442, 0.0
        %v521 = vmax.f32 %v447, 0.0
        %v522 = vmax.f32 %v452, 0.0
        %v523 = vmax.f32 %v457, 0.0
        %v524 = vmax.f32 %v462, 0.0
        %v525 = vmax.f32 %v467, 0.0
        %v526 = vmax.f32 %v472, 0.0
        %v527 = vmax.f32 %v477, 0.0
        %v528 = vmax.f32 %v482, 0.0
        %v529 = vmax.f32 %v487, 0.0
        %v530 = vmax.f32 %v492, 0.0
        %v531 = vmax.f32 %v497, 0.0
        %v532 = vmax.f32 %v502, 0.0
        %v533 = vmax.f32 %v507, 0.0
        %v534 = vmax.f32 %v512, 0.0
        %v535 = vmax.f32 %v517, 0.0
        %v536 = vld [vmem:[#allocation8] sm:$0xff]
        %v537 = vld [vmem:[#allocation8 + $0x8] sm:$0xff]
        %v538 = vld [vmem:[#allocation8 + $0x10] sm:$0xff]
        %v539 = vld [vmem:[#allocation8 + $0x18] sm:$0xff]
        %v540 = vld [vmem:[#allocation10] sm:$0x1]
        %v542 = vlaneseq
        %v543 = vshrl.u32 %v542, 7
        %v544 = vsub.s32 0, %v543
        %v545 = vrot.slane %v540, %v544
        %v548 = vsel %vm326, %v520, 0
        %v551 = vsel %vm326, %v521, 0
        %v554 = vsel %vm326, %v522, 0
        %v557 = vsel %vm326, %v523, 0
        %v560 = vsel %vm326, %v524, 0
        %v563 = vsel %vm326, %v525, 0
        %v566 = vsel %vm326, %v526, 0
        %v569 = vsel %vm326, %v527, 0
        %v572 = vsel %vm326, %v528, 0
        %v575 = vsel %vm326, %v529, 0
        %v578 = vsel %vm326, %v530, 0
        %v581 = vsel %vm326, %v531, 0
        %v584 = vsel %vm326, %v532, 0
        %v587 = vsel %vm326, %v533, 0
        %v590 = vsel %vm326, %v534, 0
        %v593 = vsel %vm326, %v535, 0
        %595 = vmatprep.subr.mxu0 0.0
        %596 = vmatpush1.msra.mxu0 %v536
        %597 = vmatprep.subr.mxu0 0.0
        %598 = vmatpush1.msra.mxu0 %v537
        %599 = vmatprep.subr.mxu0 0.0
        %600 = vmatpush1.msra.mxu0 %v538
        %601 = vmatprep.subr.mxu0 0.0
        %602 = vmatpush1.msra.mxu0 %v539
        %603 = vmatprep.subr.mxu0 0.0
        %604 = vmatpush1.msra.mxu0 0.0
        %605 = vmatprep.subr.mxu0 0.0
        %606 = vmatpush1.msra.mxu0 0.0
        %607 = vmatprep.subr.mxu0 0.0
        %608 = vmatpush1.msra.mxu0 0.0
        %609 = vmatprep.subr.mxu0 0.0
        %610 = vmatpush1.msra.mxu0 0.0
        %611 = vmatprep.subr.mxu0 0.0
        %612 = vmatpush1.msra.mxu0 0.0
        %613 = vmatprep.subr.mxu0 0.0
        %614 = vmatpush1.msra.mxu0 0.0
        %615 = vmatprep.subr.mxu0 0.0
        %616 = vmatpush1.msra.mxu0 0.0
        %617 = vmatprep.subr.mxu0 0.0
        %618 = vmatpush1.msra.mxu0 0.0
        %619 = vmatprep.subr.mxu0 0.0
        %620 = vmatpush1.msra.mxu0 0.0
        %621 = vmatprep.subr.mxu0 0.0
        %622 = vmatpush1.msra.mxu0 0.0
        %623 = vmatprep.subr.mxu0 0.0
        %624 = vmatpush1.msra.mxu0 0.0
        %625 = vmatprep.subr.mxu0 0.0
        %626 = vmatpush1.msra.mxu0 0.0
        %627 = vmatprep.subr.mxu0 0.0
        %628 = vmatpush1.msra.mxu0 0.0
        %629 = vmatprep.subr.mxu0 0.0
        %630 = vmatpush1.msra.mxu0 0.0
        %631 = vmatprep.subr.mxu0 0.0
        %632 = vmatpush1.msra.mxu0 0.0
        %633 = vmatprep.subr.mxu0 0.0
        %634 = vmatpush1.msra.mxu0 0.0
        %635 = vmatprep.subr.mxu0 0.0
        %636 = vmatpush1.msra.mxu0 0.0
        %637 = vmatprep.subr.mxu0 0.0
        %638 = vmatpush1.msra.mxu0 0.0
        %639 = vmatprep.subr.mxu0 0.0
        %640 = vmatpush1.msra.mxu0 0.0
        %641 = vmatprep.subr.mxu0 0.0
        %642 = vmatpush1.msra.mxu0 0.0
        %643 = vmatprep.subr.mxu0 0.0
        %644 = vmatpush1.msra.mxu0 0.0
        %645 = vmatprep.subr.mxu0 0.0
        %646 = vmatpush1.msra.mxu0 0.0
        %647 = vmatprep.subr.mxu0 0.0
        %648 = vmatpush1.msra.mxu0 0.0
        %649 = vmatprep.subr.mxu0 0.0
        %650 = vmatpush1.msra.mxu0 0.0
        %651 = vmatprep.subr.mxu0 0.0
        %652 = vmatpush1.msra.mxu0 0.0
        %653 = vmatprep.subr.mxu0 0.0
        %654 = vmatpush1.msra.mxu0 0.0
        %655 = vmatprep.subr.mxu0 0.0
        %656 = vmatpush1.msra.mxu0 0.0
        %657 = vmatprep.subr.mxu0 0.0
        %658 = vmatpush1.msra.mxu0 0.0
        %659 = vmatprep.mubr.f32.mxu0 0.0
        %660 = vmatmul.mubr.f32.gmra.mrb[0].mxu0 %v548
        %v661 = vpop.f32.mrb[0].mxu0
        %v662 = vadd.f32 %v545, %v661
        %v663 = vpop.f32.mrb[0].mxu0
        %664 = vmatprep.mubr.f32.mxu0 0.0
        %665 = vmatmul.mubr.f32.gmra.mrb[0].mxu0 %v551
        %v666 = vpop.f32.mrb[0].mxu0
        %v667 = vadd.f32 %v545, %v666
        %v668 = vpop.f32.mrb[0].mxu0
        %669 = vmatprep.mubr.f32.mxu0 0.0
        %670 = vmatmul.mubr.f32.gmra.mrb[0].mxu0 %v554
        %v671 = vpop.f32.mrb[0].mxu0
        %v672 = vadd.f32 %v545, %v671
        %v673 = vpop.f32.mrb[0].mxu0
        %674 = vmatprep.mubr.f32.mxu0 0.0
        %675 = vmatmul.mubr.f32.gmra.mrb[0].mxu0 %v557
        %v676 = vpop.f32.mrb[0].mxu0
        %v677 = vadd.f32 %v545, %v676
        %v678 = vpop.f32.mrb[0].mxu0
        %679 = vmatprep.mubr.f32.mxu0 0.0
        %680 = vmatmul.mubr.f32.gmra.mrb[0].mxu0 %v560
        %v681 = vpop.f32.mrb[0].mxu0
        %v682 = vadd.f32 %v545, %v681
        %v683 = vpop.f32.mrb[0].mxu0
        %684 = vmatprep.mubr.f32.mxu0 0.0
        %685 = vmatmul.mubr.f32.gmra.mrb[0].mxu0 %v563
        %v686 = vpop.f32.mrb[0].mxu0
        %v687 = vadd.f32 %v545, %v686
        %v688 = vpop.f32.mrb[0].mxu0
        %689 = vmatprep.mubr.f32.mxu0 0.0
        %690 = vmatmul.mubr.f32.gmra.mrb[0].mxu0 %v566
        %v691 = vpop.f32.mrb[0].mxu0
        %v692 = vadd.f32 %v545, %v691
        %v693 = vpop.f32.mrb[0].mxu0
        %694 = vmatprep.mubr.f32.mxu0 0.0
        %695 = vmatmul.mubr.f32.gmra.mrb[0].mxu0 %v569
        %v696 = vpop.f32.mrb[0].mxu0
        %v697 = vadd.f32 %v545, %v696
        %v698 = vpop.f32.mrb[0].mxu0
        %699 = vmatprep.mubr.f32.mxu0 0.0
        %700 = vmatmul.mubr.f32.gmra.mrb[0].mxu0 %v572
        %v701 = vpop.f32.mrb[0].mxu0
        %v702 = vadd.f32 %v545, %v701
        %v703 = vpop.f32.mrb[0].mxu0
        %704 = vmatprep.mubr.f32.mxu0 0.0
        %705 = vmatmul.mubr.f32.gmra.mrb[0].mxu0 %v575
        %v706 = vpop.f32.mrb[0].mxu0
        %v707 = vadd.f32 %v545, %v706
        %v708 = vpop.f32.mrb[0].mxu0
        %709 = vmatprep.mubr.f32.mxu0 0.0
        %710 = vmatmul.mubr.f32.gmra.mrb[0].mxu0 %v578
        %v711 = vpop.f32.mrb[0].mxu0
        %v712 = vadd.f32 %v545, %v711
        %v713 = vpop.f32.mrb[0].mxu0
        %714 = vmatprep.mubr.f32.mxu0 0.0
        %715 = vmatmul.mubr.f32.gmra.mrb[0].mxu0 %v581
        %v716 = vpop.f32.mrb[0].mxu0
        %v717 = vadd.f32 %v545, %v716
        %v718 = vpop.f32.mrb[0].mxu0
        %719 = vmatprep.mubr.f32.mxu0 0.0
        %720 = vmatmul.mubr.f32.gmra.mrb[0].mxu0 %v584
        %v721 = vpop.f32.mrb[0].mxu0
        %v722 = vadd.f32 %v545, %v721
        %v723 = vpop.f32.mrb[0].mxu0
        %724 = vmatprep.mubr.f32.mxu0 0.0
        %725 = vmatmul.mubr.f32.gmra.mrb[0].mxu0 %v587
        %v726 = vpop.f32.mrb[0].mxu0
        %v727 = vadd.f32 %v545, %v726
        %v728 = vpop.f32.mrb[0].mxu0
        %729 = vmatprep.mubr.f32.mxu0 0.0
        %730 = vmatmul.mubr.f32.gmra.mrb[0].mxu0 %v590
        %v731 = vpop.f32.mrb[0].mxu0
        %v732 = vadd.f32 %v545, %v731
        %v733 = vpop.f32.mrb[0].mxu0
        %734 = vmatprep.mubr.f32.mxu0 0.0
        %735 = vmatmul.mubr.f32.gmra.mrb[0].mxu0 %v593
        %v736 = vpop.f32.mrb[0].mxu0
        %v737 = vadd.f32 %v545, %v736
        %v738 = vpop.f32.mrb[0].mxu0
        %739 = vdwg.mxu0
        %v740 = vxor.u32 %v662, 2147483648
        %v741 = vxor.u32 %v667, 2147483648
        %v742 = vxor.u32 %v672, 2147483648
        %v743 = vxor.u32 %v677, 2147483648
        %v744 = vxor.u32 %v682, 2147483648
        %v745 = vxor.u32 %v687, 2147483648
        %v746 = vxor.u32 %v692, 2147483648
        %v747 = vxor.u32 %v697, 2147483648
        %v748 = vxor.u32 %v702, 2147483648
        %v749 = vxor.u32 %v707, 2147483648
        %v750 = vxor.u32 %v712, 2147483648
        %v751 = vxor.u32 %v717, 2147483648
        %v752 = vxor.u32 %v722, 2147483648
        %v753 = vxor.u32 %v727, 2147483648
        %v754 = vxor.u32 %v732, 2147483648
        %v755 = vxor.u32 %v737, 2147483648
        %v756 = vmul.f32 %v740, 1.442695
        %v757 = vpow.pop %v756
        %v758 = vmul.f32 %v741, 1.442695
        %v759 = vpow.pop %v758
        %v760 = vmul.f32 %v742, 1.442695
        %v761 = vpow.pop %v760
        %v762 = vmul.f32 %v743, 1.442695
        %v763 = vpow.pop %v762
        %v764 = vmul.f32 %v744, 1.442695
        %v765 = vpow.pop %v764
        %v766 = vmul.f32 %v745, 1.442695
        %v767 = vpow.pop %v766
        %v768 = vmul.f32 %v746, 1.442695
        %v769 = vpow.pop %v768
        %v770 = vmul.f32 %v747, 1.442695
        %v771 = vpow.pop %v770
        %v772 = vmul.f32 %v748, 1.442695
        %v773 = vpow.pop %v772
        %v774 = vmul.f32 %v749, 1.442695
        %v775 = vpow.pop %v774
        %v776 = vmul.f32 %v750, 1.442695
        %v777 = vpow.pop %v776
        %v778 = vmul.f32 %v751, 1.442695
        %v779 = vpow.pop %v778
        %v780 = vmul.f32 %v752, 1.442695
        %v781 = vpow.pop %v780
        %v782 = vmul.f32 %v753, 1.442695
        %v783 = vpow.pop %v782
        %v784 = vmul.f32 %v754, 1.442695
        %v785 = vpow.pop %v784
        %v786 = vmul.f32 %v755, 1.442695
        %v787 = vpow.pop %v786
        %v788 = vadd.f32 %v757, 1.0
        %v789 = vadd.f32 %v759, 1.0
        %v790 = vadd.f32 %v761, 1.0
        %v791 = vadd.f32 %v763, 1.0
        %v792 = vadd.f32 %v765, 1.0
        %v793 = vadd.f32 %v767, 1.0
        %v794 = vadd.f32 %v769, 1.0
        %v795 = vadd.f32 %v771, 1.0
        %v796 = vadd.f32 %v773, 1.0
        %v797 = vadd.f32 %v775, 1.0
        %v798 = vadd.f32 %v777, 1.0
        %v799 = vadd.f32 %v779, 1.0
        %v800 = vadd.f32 %v781, 1.0
        %v801 = vadd.f32 %v783, 1.0
        %v802 = vadd.f32 %v785, 1.0
        %v803 = vadd.f32 %v787, 1.0
        %v804 = vrcp.pop %v788
        %v805 = vmul.f32 1.0, %v804
        %v806 = vrcp.pop %v789
        %v807 = vmul.f32 1.0, %v806
        %v808 = vrcp.pop %v790
        %v809 = vmul.f32 1.0, %v808
        %v810 = vrcp.pop %v791
        %v811 = vmul.f32 1.0, %v810
        %v812 = vrcp.pop %v792
        %v813 = vmul.f32 1.0, %v812
        %v814 = vrcp.pop %v793
        %v815 = vmul.f32 1.0, %v814
        %v816 = vrcp.pop %v794
        %v817 = vmul.f32 1.0, %v816
        %v818 = vrcp.pop %v795
        %v819 = vmul.f32 1.0, %v818
        %v820 = vrcp.pop %v796
        %v821 = vmul.f32 1.0, %v820
        %v822 = vrcp.pop %v797
        %v823 = vmul.f32 1.0, %v822
        %v824 = vrcp.pop %v798
        %v825 = vmul.f32 1.0, %v824
        %v826 = vrcp.pop %v799
        %v827 = vmul.f32 1.0, %v826
        %v828 = vrcp.pop %v800
        %v829 = vmul.f32 1.0, %v828
        %v830 = vrcp.pop %v801
        %v831 = vmul.f32 1.0, %v830
        %v832 = vrcp.pop %v802
        %v833 = vmul.f32 1.0, %v832
        %v834 = vrcp.pop %v803
        %v835 = vmul.f32 1.0, %v834
        %836 = vst [vmem:[%s296] sm:$0xff] %v805
        %837 = vst [vmem:[%s296 + $0x8] sm:$0xff] %v807
        %838 = vst [vmem:[%s296 + $0x10] sm:$0xff] %v809
        %839 = vst [vmem:[%s296 + $0x18] sm:$0xff] %v811
        %840 = vst [vmem:[%s296 + $0x20] sm:$0xff] %v813
        %841 = vst [vmem:[%s296 + $0x28] sm:$0xff] %v815
        %842 = vst [vmem:[%s296 + $0x30] sm:$0xff] %v817
        %843 = vst [vmem:[%s296 + $0x38] sm:$0xff] %v819
        %844 = vst [vmem:[%s296 + $0x40] sm:$0xff] %v821
        %845 = vst [vmem:[%s296 + $0x48] sm:$0xff] %v823
        %846 = vst [vmem:[%s296 + $0x50] sm:$0xff] %v825
        %847 = vst [vmem:[%s296 + $0x58] sm:$0xff] %v827
        %848 = vst [vmem:[%s296 + $0x60] sm:$0xff] %v829
        %849 = vst [vmem:[%s296 + $0x68] sm:$0xff] %v831
        %850 = vst [vmem:[%s296 + $0x70] sm:$0xff] %v833
        %851 = vst [vmem:[%s296 + $0x78] sm:$0xff] %v835
        %s852 = sand.u32 %s142, 1
        %s853 = scalar_lea.sflag [#allocation4], %s852
        %s854 = sand.u32 %s142, 1
        %s855 = smul.addr %s854, 128
        %s856 = scalar_lea.vmem [#allocation11], %s855
        // Predicated region
        $region61: #{nonlinear_rnn_cell_y_batched.1} parent=39 // pred_check
          %p857 = pneg %p152
        $region62: #{nonlinear_rnn_cell_y_batched.1} parent=39 // pred_check_branch
          %859 = sbr.rel (%p857) target = $region64
        $region63: #{nonlinear_rnn_cell_y_batched.1} parent=39 // pred_region
          %s860 = smul.u32 16, %s24
          %s862 = ssub.s32 2048, 2048
          %863 = vsyncadd %s853, %s862
          %s864 = smul.addr %s860, 128
          %s865 = scalar_lea.hbm %s5, %s864
          %s866 = sshll.u32 %s856, 4
          %s867 = int_to_ptr.vmem [resolvable:$true] %s866
          %872 = dma.vmem_to_hbm [thread:$0]  %s867, 2048, %s865, %s853, 128, 128, 8
        $region64: #{nonlinear_rnn_cell_y_batched.1} parent=39 // pred_fallthru
          _
      $region40: #{nonlinear_rnn_cell_y_batched.1} parent=5 // pred_fallthru
        _
      %p873 = scmp.le.s32.totalorder 2, %s19
      // Predicated region
      $region65: #{nonlinear_rnn_cell_y_batched.1} parent=5 // pred_check
        %p874 = pneg %p873
      $region66: #{nonlinear_rnn_cell_y_batched.1} parent=5 // pred_check_branch
        %876 = sbr.rel (%p874) target = $region68
      $region67: #{nonlinear_rnn_cell_y_batched.1} parent=5 // pred_region
        %s877 = ssub.s32 %s19, 2
        // Predicated region
        $region69: #{nonlinear_rnn_cell_y_batched.1} parent=67 // pred_check
          %p878 = pneg %p158
        $region70: #{nonlinear_rnn_cell_y_batched.1} parent=67 // pred_check_branch
          %880 = sbr.rel (%p878) target = $region72
        $region71: #{nonlinear_rnn_cell_y_batched.1} parent=67 // pred_region
          %s881 = sand.u32 %s143, 1
          %s882 = scalar_lea.sflag [#allocation4], %s881
          %s883 = sand.u32 %s143, 1
          %s884 = smul.addr %s883, 128
          %s885 = scalar_lea.vmem [#allocation11], %s884
          %886 = dma.done %s882, 2048
        $region72: #{nonlinear_rnn_cell_y_batched.1} parent=67 // pred_fallthru
          _
      $region68: #{nonlinear_rnn_cell_y_batched.1} parent=5 // pred_fallthru
        _
    $region6: #{nonlinear_rnn_cell_y_batched.1} parent=1 // loop_footer
      %s23 = sadd.s32 1, %s19
    $region7: #{nonlinear_rnn_cell_y_batched.1} parent=1 // loop_footer_branch
      %18 = sbr.rel target = $region3
    $region8: #{nonlinear_rnn_cell_y_batched.1} parent=1 // loop_exit
      _
    %887 = vsyncpa [#allocation3], 1
    %s888 = scalar_lea.sflag [#allocation3], 1
    %889 = vsyncpa %s888, 1
    %890 = vsyncpa [#allocation6], 1
    %891 = vsyncpa [#allocation9], 1
    %892 = vsyncpa [#allocation4], 1
    %s893 = scalar_lea.sflag [#allocation4], 1
    %894 = vsyncpa %s893, 1

</llo_original>
